<compile_context>
chip_gen: v5e
topology: v5e:2x2
jax: 0.10.0
libtpu: 0.0.40
codegen_flags: <defaults>
</compile_context>

<pallas_src>
import jax
import jax.numpy as jnp
from jax import lax
from jax.experimental import pallas as pl
from jax.experimental.pallas import tpu as pltpu


def _shelves_kernel(obj_ref, schema_ref, bias_p_ref, bias_s_ref, o_ref):
    """Forward pass for one batch element (one full model instance per grid step).

    obj_ref    : (H, P) object-pair preference matrix (module layout, NOT pre-transposed).
    schema_ref : (H, S) schema preference matrix.
    bias_p_ref : (P, 1) per-pair biases.
    bias_s_ref : (1, S) per-schema biases.
    o_ref      : (P, S) predicted rating matrix.
    """
    # Contract over H (axis 0 of both operands): (H,P) x (H,S) -> (P,S) on the MXU.
    acc = lax.dot_general(
        obj_ref[...], schema_ref[...],
        dimension_numbers=(((0,), (0,)), ((), ())),
        preferred_element_type=jnp.float32,
        precision=lax.Precision.HIGHEST,
    )
    # Bias adds stay in f32 on the VPU (v5e has no bf16 vector ALU).
    o_ref[...] = acc + bias_p_ref[...] + bias_s_ref[...]


def organize_my_shelves_forward_batched(obj_pref, schema_pref, bias_pairs, bias_schemas):
    """Batched Pallas forward pass over B independent model instances.

    Args:
      obj_pref:     (B, H, P) object-pair preference matrices.
      schema_pref:  (B, H, S) schema preference matrices.
      bias_pairs:   (B, P, 1) per-pair biases.
      bias_schemas: (B, 1, S) per-schema biases.
    Returns:
      (B, P * S) flattened predicted rating matrices.
    """
    B, H, P = obj_pref.shape
    _, H2, S = schema_pref.shape
    assert H == H2, "hidden dimensions must match"
    assert bias_pairs.shape == (B, P, 1)
    assert bias_schemas.shape == (B, 1, S)

    cost = pl.CostEstimate(
        flops=2 * B * P * H * S,
        transcendentals=0,
        bytes_accessed=4 * B * (H * P + H * S + P + S + P * S),
    )

    # One grid step per batch element; each step's working set (~27 KiB f32)
    # is a single full-array VMEM block per operand (blocked specs are
    # VMEM-resident by default), so the BlockSpec pipeline just overlaps the
    # next element's DMAs with the current matmul.  "parallel" lets Mosaic
    # shard the batch axis across the 2 TensorCores on v7x.
    out = pl.pallas_call(
        _shelves_kernel,
        grid=(B,),
        in_specs=[
            pl.BlockSpec((None, H, P), lambda b: (b, 0, 0)),
            pl.BlockSpec((None, H, S), lambda b: (b, 0, 0)),
            pl.BlockSpec((None, P, 1), lambda b: (b, 0, 0)),
            pl.BlockSpec((None, 1, S), lambda b: (b, 0, 0)),
        ],
        out_specs=pl.BlockSpec((None, P, S), lambda b: (b, 0, 0)),
        out_shape=jax.ShapeDtypeStruct((B, P, S), jnp.float32),
        compiler_params=pltpu.CompilerParams(
            dimension_semantics=("parallel",),
        ),
        cost_estimate=cost,
    )(obj_pref, schema_pref, bias_pairs, bias_schemas)

    # Row-major flatten per batch element (free bitcast: last dim is 128-wide).
    return out.reshape(B, P * S)


def organize_my_shelves_forward(obj_pref, schema_pref, bias_pairs, bias_schemas):
    """Unbatched forward matching the PyTorch module exactly.

    Args:
      obj_pref:     (H, P), schema_pref: (H, S), bias_pairs: (P, 1), bias_schemas: (1, S).
    Returns:
      (P * S,) flattened predicted rating matrix.
    """
    r = organize_my_shelves_forward_batched(
        obj_pref[None], schema_pref[None], bias_pairs[None], bias_schemas[None])
    return r[0]


def _kaiming_uniform(key, shape, a=jnp.sqrt(5.0)):
    """Deterministic stand-in for nn.init.kaiming_uniform_(a=sqrt(5)) (fan_in mode)."""
    fan_in = shape[-1] if len(shape) > 1 else shape[0]
    gain = jnp.sqrt(2.0 / (1.0 + a * a))
    bound = gain * jnp.sqrt(3.0 / fan_in)
    return jax.random.uniform(key, shape, jnp.float32, -bound, bound)


if __name__ == "__main__":
    hidden_dimension = 32
    num_pairs = 16
    num_schemas = 128
    batch = 4  # batched demo: 4 independent model instances in one launch

    key = jax.random.PRNGKey(0)
    k1, k2, k3, k4 = jax.random.split(key, 4)

    # Batched parameter sets (index 0 doubles as the single-model case).
    biases_obj_pair = _kaiming_uniform(k1, (batch, num_pairs, 1))
    biases_schema = _kaiming_uniform(k2, (batch, 1, num_schemas))
    obj_preference_matrix = _kaiming_uniform(k3, (batch, hidden_dimension, num_pairs))
    schema_preference_matrix = _kaiming_uniform(k4, (batch, hidden_dimension, num_schemas))

    # --- Unbatched forward (exact module semantics) ---------------------------------
    r_pred_flat = organize_my_shelves_forward(
        obj_preference_matrix[0], schema_preference_matrix[0],
        biases_obj_pair[0], biases_schema[0])
    r_pred_flat = jax.block_until_ready(r_pred_flat)

    ref_single = (biases_obj_pair[0] + biases_schema[0]
                  + obj_preference_matrix[0].T @ schema_preference_matrix[0]).reshape(-1)
    assert r_pred_flat.shape == (num_pairs * num_schemas,)
    assert jnp.allclose(r_pred_flat, ref_single, atol=1e-5, rtol=1e-5)

    # --- Batched forward (one pallas_call, grid over the batch axis) ----------------
    r_pred_batched = organize_my_shelves_forward_batched(
        obj_preference_matrix, schema_preference_matrix,
        biases_obj_pair, biases_schema)
    r_pred_batched = jax.block_until_ready(r_pred_batched)

    ref_batched = (biases_obj_pair + biases_schema
                   + jnp.einsum("bhp,bhs->bps", obj_preference_matrix,
                                schema_preference_matrix)).reshape(batch, -1)
    assert r_pred_batched.shape == (batch, num_pairs * num_schemas)
    assert jnp.allclose(r_pred_batched, ref_batched, atol=1e-5, rtol=1e-5)
    assert jnp.allclose(r_pred_batched[0], r_pred_flat, atol=1e-6, rtol=1e-6)

    # TODO(synk): calculate_loss (gather-based MSE + regularization) is training-only
    # and left in plain JAX land; only forward() is kernelized here.

    print("KERNEL_OK")
</pallas_src>

<mosaic_0001>
module attributes {stable_mosaic.version = 11 : i64} {
  func.func @_shelves_kernel(%arg0: i32, %arg1: memref<1x32x16xf32, #tpu.memory_space<vmem>>, %arg2: memref<1x32x128xf32, #tpu.memory_space<vmem>>, %arg3: memref<1x16x1xf32, #tpu.memory_space<vmem>>, %arg4: memref<1x1x128xf32, #tpu.memory_space<vmem>>, %arg5: memref<1x16x128xf32, #tpu.memory_space<vmem>>) attributes {dimension_semantics = [#tpu.dimension_semantics<parallel>], iteration_bounds = array<i64: 1>, scalar_prefetch = 0 : i64, scratch_operands = 0 : i64, tpu.core_type = #tpu.core_type<tc>, window_params = [{transform_indices = @transform_0, window_bounds = array<i64: 1, 32, 16>}, {transform_indices = @transform_1, window_bounds = array<i64: 1, 32, 128>}, {transform_indices = @transform_2, window_bounds = array<i64: 1, 16, 1>}, {transform_indices = @transform_3, window_bounds = array<i64: 1, 1, 128>}, {transform_indices = @transform_4, window_bounds = array<i64: 1, 16, 128>}]} {
    %c0 = arith.constant 0 : index
    %c0_0 = arith.constant 0 : index
    %c0_1 = arith.constant 0 : index
    %0 = vector.load %arg1[%c0, %c0_0, %c0_1] : memref<1x32x16xf32, #tpu.memory_space<vmem>>, vector<1x32x16xf32>
    %1 = vector.shape_cast %0 : vector<1x32x16xf32> to vector<32x16xf32>
    %c0_2 = arith.constant 0 : index
    %c0_3 = arith.constant 0 : index
    %c0_4 = arith.constant 0 : index
    %2 = vector.load %arg2[%c0_2, %c0_3, %c0_4] : memref<1x32x128xf32, #tpu.memory_space<vmem>>, vector<1x32x128xf32>
    %3 = vector.shape_cast %2 : vector<1x32x128xf32> to vector<32x128xf32>
    %cst = arith.constant dense<0.000000e+00> : vector<16x128xf32>
    %4 = tpu.matmul %1, %3, %cst {dimension_numbers = #tpu.dot_dimension_numbers<[0], [0], [1], [1], [0, 1, 1, 1], [], []>, precision = #tpu.contract_precision<fp32>} : vector<32x16xf32>, vector<32x128xf32>, vector<16x128xf32> -> vector<16x128xf32>
    %c0_5 = arith.constant 0 : index
    %c0_6 = arith.constant 0 : index
    %c0_7 = arith.constant 0 : index
    %5 = vector.load %arg3[%c0_5, %c0_6, %c0_7] : memref<1x16x1xf32, #tpu.memory_space<vmem>>, vector<1x16x1xf32>
    %6 = vector.shape_cast %5 : vector<1x16x1xf32> to vector<16x1xf32>
    %7 = vector.broadcast %6 : vector<16x1xf32> to vector<16x128xf32>
    %8 = arith.addf %4, %7 : vector<16x128xf32>
    %c0_8 = arith.constant 0 : index
    %c0_9 = arith.constant 0 : index
    %c0_10 = arith.constant 0 : index
    %9 = vector.load %arg4[%c0_8, %c0_9, %c0_10] : memref<1x1x128xf32, #tpu.memory_space<vmem>>, vector<1x1x128xf32>
    %10 = vector.shape_cast %9 : vector<1x1x128xf32> to vector<1x128xf32>
    %11 = vector.broadcast %10 : vector<1x128xf32> to vector<16x128xf32>
    %12 = arith.addf %8, %11 : vector<16x128xf32>
    %c0_11 = arith.constant 0 : index
    %c0_12 = arith.constant 0 : index
    %c0_13 = arith.constant 0 : index
    %13 = vector.load %arg5[%c0_11, %c0_12, %c0_13] : memref<1x16x128xf32, #tpu.memory_space<vmem>>, vector<1x16x128xf32>
    %14 = vector.shape_cast %13 : vector<1x16x128xf32> to vector<16x128xf32>
    %15 = vector.shape_cast %12 : vector<16x128xf32> to vector<1x16x128xf32>
    tpu.vector_store %arg5[%c0_11, %c0_12, %c0_13], %15 {strides = array<i32>} : memref<1x16x128xf32, #tpu.memory_space<vmem>>, vector<1x16x128xf32>,
    return
  }
  func.func @transform_0(%arg0: i32) -> (i32, i32, i32) {
    %c0_i32 = arith.constant 0 : i32
    %c0_i32_0 = arith.constant 0 : i32
    %c0_i32_1 = arith.constant 0 : i32
    return %arg0, %c0_i32, %c0_i32_0 : i32, i32, i32
  }
  func.func @transform_1(%arg0: i32) -> (i32, i32, i32) {
    %c0_i32 = arith.constant 0 : i32
    %c0_i32_0 = arith.constant 0 : i32
    %c0_i32_1 = arith.constant 0 : i32
    return %arg0, %c0_i32, %c0_i32_0 : i32, i32, i32
  }
  func.func @transform_2(%arg0: i32) -> (i32, i32, i32) {
    %c0_i32 = arith.constant 0 : i32
    %c0_i32_0 = arith.constant 0 : i32
    %c0_i32_1 = arith.constant 0 : i32
    return %arg0, %c0_i32, %c0_i32_0 : i32, i32, i32
  }
  func.func @transform_3(%arg0: i32) -> (i32, i32, i32) {
    %c0_i32 = arith.constant 0 : i32
    %c0_i32_0 = arith.constant 0 : i32
    %c0_i32_1 = arith.constant 0 : i32
    return %arg0, %c0_i32, %c0_i32_0 : i32, i32, i32
  }
  func.func @transform_4(%arg0: i32) -> (i32, i32, i32) {
    %c0_i32 = arith.constant 0 : i32
    %c0_i32_0 = arith.constant 0 : i32
    %c0_i32_1 = arith.constant 0 : i32
    return %arg0, %c0_i32, %c0_i32_0 : i32, i32, i32
  }
}

</mosaic_0001>

<llo_original>
// kernel: tpu_custom_call.1
$region0: #{tpu_custom_call.1}
  #allocation0 [shape = 'u32[]', space=smem, size = 0x4, offset = 0x4, fixed_abs, tag = 'smem constant byte address 0x4 - core index']
  #allocation1 [shape = 'u32[72,128]{1,0:T(1,128)}', space=vmem, size = 0x9000, scoped, tag = 'internal scratch']
  %s0 = inlined_call_operand.vmem [shape: f32[1,32,16], index: 0, kind: input, shape index: {}]
  %s1 = inlined_call_operand.vmem [shape: f32[1,32,128], index: 1, kind: input, shape index: {}]
  %s2 = inlined_call_operand.vmem [shape: f32[1,16,1], index: 2, kind: input, shape index: {}]
  %s3 = inlined_call_operand.vmem [shape: f32[1,1,128], index: 3, kind: input, shape index: {}]
  %s4 = inlined_call_operand.hbm [shape: f32[1,16,128], index: 4, kind: output, shape index: {}]
  %s5 = sld [smem:[#allocation0]]
  $region26: #{tpu_custom_call.1} parent=0
    _
  %s7 = ssub.s32 1, %s5
  %s8 = scalar_select 0, %s7, %s5
  $region1: #{tpu_custom_call.1} parent=0
    #allocation2 [shape = 'u8[8192]{0}', space=vmem, size = 0x2000, scoped, tag = 'output window, operand 0, single buffered']
    #allocation3 [shape = 's32[1]{0}', space=sflag, size = 0x4, scoped, tag = 'scoped memory for tpu_custom_call.1']
    %9 = vsyncpa [#allocation3], 0
    // Predicated region
    $region2: #{tpu_custom_call.1} parent=1 // pred_check
      _
    $region3: #{tpu_custom_call.1} parent=1 // pred_check_branch
      %11 = sbr.rel (0) target = $region5
    $region4: #{tpu_custom_call.1} parent=1 // pred_region
      _
    $region5: #{tpu_custom_call.1} parent=1 // pred_fallthru
      _
    // Predicated region
    $region6: #{tpu_custom_call.1} parent=1 // pred_check
      _
    $region7: #{tpu_custom_call.1} parent=1 // pred_check_branch
      %13 = sbr.rel (0) target = $region9
    $region8: #{tpu_custom_call.1} parent=1 // pred_region
      _
    $region9: #{tpu_custom_call.1} parent=1 // pred_fallthru
      _
    // Predicated region
    $region10: #{tpu_custom_call.1} parent=1 // pred_check
      _
    $region11: #{tpu_custom_call.1} parent=1 // pred_check_branch
      %15 = sbr.rel (0) target = $region13
    $region12: #{tpu_custom_call.1} parent=1 // pred_region
      _
    $region13: #{tpu_custom_call.1} parent=1 // pred_fallthru
      _
    // Predicated region
    $region14: #{tpu_custom_call.1} parent=1 // pred_check
      _
    $region15: #{tpu_custom_call.1} parent=1 // pred_check_branch
      %17 = sbr.rel (0) target = $region17
    $region16: #{tpu_custom_call.1} parent=1 // pred_region
      _
    $region17: #{tpu_custom_call.1} parent=1 // pred_fallthru
      _
    %v18 = vld [vmem:[%s0] sm:$0xff]
    %v19 = vld [vmem:[%s0 + $0x8] sm:$0xff]
    %v20 = vld [vmem:[%s0 + $0x10] sm:$0xff]
    %v21 = vld [vmem:[%s0 + $0x18] sm:$0xff]
    %v22 = vld [vmem:[%s1] sm:$0xff]
    %v23 = vld [vmem:[%s1 + $0x8] sm:$0xff]
    %v24 = vld [vmem:[%s1 + $0x10] sm:$0xff]
    %v25 = vld [vmem:[%s1 + $0x18] sm:$0xff]
    %v26 = vld [vmem:[%s2] sm:$0xff]
    %v27 = vld [vmem:[%s2 + $0x8] sm:$0xff]
    %29 = vset.pattern.permute.xlu0 0
    %30 = vperm.xlu0 %29, %v26
    %v31 = vpop.permute.xlu0 %30
    %34 = vset.pattern.permute.xlu0 0
    %35 = vperm.xlu0 %34, %v27
    %v36 = vpop.permute.xlu0 %35
    %38 = vxpose.xlu0.b32.start [1/16] %v18, 128
    %39 = vxpose.xlu0.b32.cont [2/16] %v19, 128
    %40 = vxpose.xlu0.b32.cont [3/16] %v20, 128
    %41 = vxpose.xlu0.b32.cont [4/16] %v21, 128
    %42 = vxpose.xlu0.b32.cont [5/16] 0.0, 128
    %43 = vxpose.xlu0.b32.cont [6/16] 0.0, 128
    %44 = vxpose.xlu0.b32.cont [7/16] 0.0, 128
    %45 = vxpose.xlu0.b32.cont [8/16] 0.0, 128
    %46 = vxpose.xlu0.b32.cont [9/16] 0.0, 128
    %47 = vxpose.xlu0.b32.cont [10/16] 0.0, 128
    %48 = vxpose.xlu0.b32.cont [11/16] 0.0, 128
    %49 = vxpose.xlu0.b32.cont [12/16] 0.0, 128
    %50 = vxpose.xlu0.b32.cont [13/16] 0.0, 128
    %51 = vxpose.xlu0.b32.cont [14/16] 0.0, 128
    %52 = vxpose.xlu0.b32.cont [15/16] 0.0, 128
    %53 = vxpose.xlu0.b32.end [16/16] 0.0, 128
    %v54 = vpop.trf.xlu0
    %v55 = vpop.trf.xlu0
    %v56 = vpop.trf.xlu0
    %v57 = vpop.trf.xlu0
    %v58 = vpop.trf.xlu0
    %v59 = vpop.trf.xlu0
    %v60 = vpop.trf.xlu0
    %v61 = vpop.trf.xlu0
    %v62 = vpop.trf.xlu0
    %v63 = vpop.trf.xlu0
    %v64 = vpop.trf.xlu0
    %v65 = vpop.trf.xlu0
    %v66 = vpop.trf.xlu0
    %v67 = vpop.trf.xlu0
    %v68 = vpop.trf.xlu0
    %v69 = vpop.trf.xlu0
    %vm70 = vcmask 261120
    %v72 = vsel %vm70, %v54, 0
    %v75 = vsel %vm70, %v55, 0
    %77 = vmatpush.msra.mxu0 0.0
    %78 = vmatpush.msra.mxu0 0.0
    %79 = vmatpush.msra.mxu0 0.0
    %80 = vmatpush.msra.mxu0 0.0
    %81 = vmatpush.msra.mxu0 0.0
    %82 = vmatpush.msra.mxu0 0.0
    %83 = vmatpush.msra.mxu0 0.0
    %84 = vmatpush.msra.mxu0 0.0
    %85 = vmatpush.msra.mxu0 0.0
    %86 = vmatpush.msra.mxu0 0.0
    %87 = vmatpush.msra.mxu0 0.0
    %88 = vmatpush.msra.mxu0 0.0
    %v89 = vand.u32 %v25, 4294901760
    %90 = vmatpush.msra.mxu0 %v89
    %v91 = vand.u32 %v24, 4294901760
    %92 = vmatpush.msra.mxu0 %v91
    %v93 = vand.u32 %v23, 4294901760
    %94 = vmatpush.msra.mxu0 %v93
    %v95 = vand.u32 %v22, 4294901760
    %96 = vmatpush.msra.mxu0 %v95
    %v97 = vand.u32 %v72, 4294901760
    %v98 = vsub.f32 %v72, %v97
    %v99 = vand.u32 %v98, 4294901760
    %v100 = vsub.f32 %v98, %v99
    %v101 = vand.u32 %v100, 4294901760
    %102 = vmatmul.f32.gmra.mxu0 %v101
    %v103 = vpop.f32.mrf.mxu0
    %v104 = vadd.f32 %v31, %v103
    %v105 = vand.u32 %v75, 4294901760
    %v106 = vsub.f32 %v75, %v105
    %v107 = vand.u32 %v106, 4294901760
    %v108 = vsub.f32 %v106, %v107
    %v109 = vand.u32 %v108, 4294901760
    %110 = vmatmul.f32.gmra.mxu0 %v109
    %v111 = vpop.f32.mrf.mxu0
    %v112 = vadd.f32 %v36, %v111
    %113 = vdwg.mxu0
    %114 = vmatpush.msra.mxu0 0.0
    %115 = vmatpush.msra.mxu0 0.0
    %116 = vmatpush.msra.mxu0 0.0
    %117 = vmatpush.msra.mxu0 0.0
    %118 = vmatpush.msra.mxu0 0.0
    %119 = vmatpush.msra.mxu0 0.0
    %120 = vmatpush.msra.mxu0 0.0
    %121 = vmatpush.msra.mxu0 0.0
    %122 = vmatpush.msra.mxu0 0.0
    %123 = vmatpush.msra.mxu0 0.0
    %124 = vmatpush.msra.mxu0 0.0
    %125 = vmatpush.msra.mxu0 0.0
    %v126 = vand.u32 %v25, 4294901760
    %v127 = vsub.f32 %v25, %v126
    %v128 = vand.u32 %v127, 4294901760
    %v129 = vsub.f32 %v127, %v128
    %v130 = vand.u32 %v129, 4294901760
    %131 = vmatpush.msra.mxu0 %v130
    %v132 = vand.u32 %v24, 4294901760
    %v133 = vsub.f32 %v24, %v132
    %v134 = vand.u32 %v133, 4294901760
    %v135 = vsub.f32 %v133, %v134
    %v136 = vand.u32 %v135, 4294901760
    %137 = vmatpush.msra.mxu0 %v136
    %v138 = vand.u32 %v23, 4294901760
    %v139 = vsub.f32 %v23, %v138
    %v140 = vand.u32 %v139, 4294901760
    %v141 = vsub.f32 %v139, %v140
    %v142 = vand.u32 %v141, 4294901760
    %143 = vmatpush.msra.mxu0 %v142
    %v144 = vand.u32 %v22, 4294901760
    %v145 = vsub.f32 %v22, %v144
    %v146 = vand.u32 %v145, 4294901760
    %v147 = vsub.f32 %v145, %v146
    %v148 = vand.u32 %v147, 4294901760
    %149 = vmatpush.msra.mxu0 %v148
    %v150 = vand.u32 %v72, 4294901760
    %151 = vmatmul.f32.gmra.mxu0 %v150
    %v152 = vpop.f32.mrf.mxu0
    %v153 = vadd.f32 %v104, %v152
    %v154 = vand.u32 %v75, 4294901760
    %155 = vmatmul.f32.gmra.mxu0 %v154
    %v156 = vpop.f32.mrf.mxu0
    %v157 = vadd.f32 %v112, %v156
    %158 = vdwg.mxu0
    %159 = vmatpush.msra.mxu0 0.0
    %160 = vmatpush.msra.mxu0 0.0
    %161 = vmatpush.msra.mxu0 0.0
    %162 = vmatpush.msra.mxu0 0.0
    %163 = vmatpush.msra.mxu0 0.0
    %164 = vmatpush.msra.mxu0 0.0
    %165 = vmatpush.msra.mxu0 0.0
    %166 = vmatpush.msra.mxu0 0.0
    %167 = vmatpush.msra.mxu0 0.0
    %168 = vmatpush.msra.mxu0 0.0
    %169 = vmatpush.msra.mxu0 0.0
    %170 = vmatpush.msra.mxu0 0.0
    %v171 = vand.u32 %v25, 4294901760
    %v172 = vsub.f32 %v25, %v171
    %173 = vmatpush.msra.mxu0 %v172
    %v174 = vand.u32 %v24, 4294901760
    %v175 = vsub.f32 %v24, %v174
    %176 = vmatpush.msra.mxu0 %v175
    %v177 = vand.u32 %v23, 4294901760
    %v178 = vsub.f32 %v23, %v177
    %179 = vmatpush.msra.mxu0 %v178
    %v180 = vand.u32 %v22, 4294901760
    %v181 = vsub.f32 %v22, %v180
    %182 = vmatpush.msra.mxu0 %v181
    %v183 = vand.u32 %v72, 4294901760
    %v184 = vsub.f32 %v72, %v183
    %185 = vmatmul.f32.gmra.mxu0 %v184
    %v186 = vpop.f32.mrf.mxu0
    %v187 = vadd.f32 %v153, %v186
    %v188 = vand.u32 %v75, 4294901760
    %v189 = vsub.f32 %v75, %v188
    %190 = vmatmul.f32.gmra.mxu0 %v189
    %v191 = vpop.f32.mrf.mxu0
    %v192 = vadd.f32 %v157, %v191
    %193 = vdwg.mxu0
    %194 = vmatpush.msra.mxu0 0.0
    %195 = vmatpush.msra.mxu0 0.0
    %196 = vmatpush.msra.mxu0 0.0
    %197 = vmatpush.msra.mxu0 0.0
    %198 = vmatpush.msra.mxu0 0.0
    %199 = vmatpush.msra.mxu0 0.0
    %200 = vmatpush.msra.mxu0 0.0
    %201 = vmatpush.msra.mxu0 0.0
    %202 = vmatpush.msra.mxu0 0.0
    %203 = vmatpush.msra.mxu0 0.0
    %204 = vmatpush.msra.mxu0 0.0
    %205 = vmatpush.msra.mxu0 0.0
    %v206 = vand.u32 %v25, 4294901760
    %207 = vmatpush.msra.mxu0 %v206
    %v208 = vand.u32 %v24, 4294901760
    %209 = vmatpush.msra.mxu0 %v208
    %v210 = vand.u32 %v23, 4294901760
    %211 = vmatpush.msra.mxu0 %v210
    %v212 = vand.u32 %v22, 4294901760
    %213 = vmatpush.msra.mxu0 %v212
    %v214 = vand.u32 %v72, 4294901760
    %v215 = vsub.f32 %v72, %v214
    %v216 = vand.u32 %v215, 4294901760
    %217 = vmatmul.f32.gmra.mxu0 %v216
    %v218 = vpop.f32.mrf.mxu0
    %v219 = vadd.f32 %v187, %v218
    %v220 = vand.u32 %v75, 4294901760
    %v221 = vsub.f32 %v75, %v220
    %v222 = vand.u32 %v221, 4294901760
    %223 = vmatmul.f32.gmra.mxu0 %v222
    %v224 = vpop.f32.mrf.mxu0
    %v225 = vadd.f32 %v192, %v224
    %226 = vdwg.mxu0
    %227 = vmatpush.msra.mxu0 0.0
    %228 = vmatpush.msra.mxu0 0.0
    %229 = vmatpush.msra.mxu0 0.0
    %230 = vmatpush.msra.mxu0 0.0
    %231 = vmatpush.msra.mxu0 0.0
    %232 = vmatpush.msra.mxu0 0.0
    %233 = vmatpush.msra.mxu0 0.0
    %234 = vmatpush.msra.mxu0 0.0
    %235 = vmatpush.msra.mxu0 0.0
    %236 = vmatpush.msra.mxu0 0.0
    %237 = vmatpush.msra.mxu0 0.0
    %238 = vmatpush.msra.mxu0 0.0
    %v239 = vand.u32 %v25, 4294901760
    %v240 = vsub.f32 %v25, %v239
    %v241 = vand.u32 %v240, 4294901760
    %242 = vmatpush.msra.mxu0 %v241
    %v243 = vand.u32 %v24, 4294901760
    %v244 = vsub.f32 %v24, %v243
    %v245 = vand.u32 %v244, 4294901760
    %246 = vmatpush.msra.mxu0 %v245
    %v247 = vand.u32 %v23, 4294901760
    %v248 = vsub.f32 %v23, %v247
    %v249 = vand.u32 %v248, 4294901760
    %250 = vmatpush.msra.mxu0 %v249
    %v251 = vand.u32 %v22, 4294901760
    %v252 = vsub.f32 %v22, %v251
    %v253 = vand.u32 %v252, 4294901760
    %254 = vmatpush.msra.mxu0 %v253
    %v255 = vand.u32 %v72, 4294901760
    %256 = vmatmul.f32.gmra.mxu0 %v255
    %v257 = vpop.f32.mrf.mxu0
    %v258 = vadd.f32 %v219, %v257
    %v259 = vand.u32 %v75, 4294901760
    %260 = vmatmul.f32.gmra.mxu0 %v259
    %v261 = vpop.f32.mrf.mxu0
    %v262 = vadd.f32 %v225, %v261
    %263 = vdwg.mxu0
    %264 = vmatpush.msra.mxu0 0.0
    %265 = vmatpush.msra.mxu0 0.0
    %266 = vmatpush.msra.mxu0 0.0
    %267 = vmatpush.msra.mxu0 0.0
    %268 = vmatpush.msra.mxu0 0.0
    %269 = vmatpush.msra.mxu0 0.0
    %270 = vmatpush.msra.mxu0 0.0
    %271 = vmatpush.msra.mxu0 0.0
    %272 = vmatpush.msra.mxu0 0.0
    %273 = vmatpush.msra.mxu0 0.0
    %274 = vmatpush.msra.mxu0 0.0
    %275 = vmatpush.msra.mxu0 0.0
    %v276 = vand.u32 %v25, 4294901760
    %277 = vmatpush.msra.mxu0 %v276
    %v278 = vand.u32 %v24, 4294901760
    %279 = vmatpush.msra.mxu0 %v278
    %v280 = vand.u32 %v23, 4294901760
    %281 = vmatpush.msra.mxu0 %v280
    %v282 = vand.u32 %v22, 4294901760
    %283 = vmatpush.msra.mxu0 %v282
    %v284 = vand.u32 %v72, 4294901760
    %285 = vmatmul.f32.gmra.mxu0 %v284
    %v286 = vpop.f32.mrf.mxu0
    %v287 = vadd.f32 %v258, %v286
    %v288 = vand.u32 %v75, 4294901760
    %289 = vmatmul.f32.gmra.mxu0 %v288
    %v290 = vpop.f32.mrf.mxu0
    %v291 = vadd.f32 %v262, %v290
    %292 = vdwg.mxu0
    %v293 = vld [vmem:[%s3] sm:$0x1]
    %v295 = vperm.slane %v293, 0
    %v297 = vadd.f32 %v287, %v295
    %v298 = vadd.f32 %v291, %v295
    %299 = vst [vmem:[#allocation2] sm:$0xff] %v297
    %300 = vst [vmem:[#allocation2 + $0x8] sm:$0xff] %v298
    // Predicated region
    $region18: #{tpu_custom_call.1} parent=1 // pred_check
      _
    $region19: #{tpu_custom_call.1} parent=1 // pred_check_branch
      %302 = sbr.rel (0) target = $region21
    $region20: #{tpu_custom_call.1} parent=1 // pred_region
      %304 = vsyncadd [#allocation3], 0
      %s305 = sshll.u32 [#allocation2], 4
      %s306 = int_to_ptr.vmem [resolvable:$true] %s305
      %s307 = sshll.u32 %s4, 4
      %s308 = int_to_ptr.hbm [resolvable:$true] %s307
      %313 = dma.vmem_to_hbm [thread:$0]  %s306, 256, %s308, [#allocation3], 128, 128, 8
    $region21: #{tpu_custom_call.1} parent=1 // pred_fallthru
      _
    // Predicated region
    $region22: #{tpu_custom_call.1} parent=1 // pred_check
      _
    $region23: #{tpu_custom_call.1} parent=1 // pred_check_branch
      %315 = sbr.rel (0) target = $region25
    $region24: #{tpu_custom_call.1} parent=1 // pred_region
      %317 = dma.done [#allocation3], 256
    $region25: #{tpu_custom_call.1} parent=1 // pred_fallthru
      _
    %318 = vsyncpa [#allocation3], 1

</llo_original>
